<compile_context>
chip_gen: v7x
topology: tpu7x:2x2x1
jax: 0.10.0
libtpu: 0.0.40
codegen_flags: <defaults>
</compile_context>

<pallas_src>
import functools

import jax
import jax.numpy as jnp
from jax.experimental import pallas as pl
from jax.experimental.pallas import tpu as pltpu

BN_EPS = 1e-5       # nn.BatchNorm1d default eps
NORM_EPS = 1e-12    # F.normalize default eps


def _projection_kernel(x_ref, w1_ref, gb_ref, w2_ref, o_ref, h_acc, *,
                       inv_b, tk):
    """grid = (nj, nk): j tiles hidden dim H, k tiles the D_in contraction.

    x is VMEM-resident (constant block index) and sliced per k.  The (B, D_out)
    output block is VMEM-resident across the whole grid and doubles as the
    matmul-2 accumulator; it is L2-normalized in place on the last step.
    """
    j = pl.program_id(0)
    k = pl.program_id(1)
    nj = pl.num_programs(0)
    nk = pl.num_programs(1)

    @pl.when((j == 0) & (k == 0))
    def _init_out():
        o_ref[...] = jnp.zeros_like(o_ref)

    @pl.when(k == 0)
    def _init_h():
        h_acc[...] = jnp.zeros_like(h_acc)

    # Matmul-1 partial product: (B, tk) @ (tk, th) with f32 MXU accumulation.
    off = pl.multiple_of(k * tk, tk)
    h_acc[...] += jnp.dot(x_ref[:, pl.ds(off, tk)], w1_ref[...],
                          preferred_element_type=jnp.float32)

    @pl.when(k == nk - 1)
    def _bn_relu_matmul2():
        h = h_acc[...]                                       # (B, th) f32

        # BatchNorm1d training-mode batch stats (biased variance), folded into
        # a single scale/shift pass.  The Linear bias cancels in (h - mean) so
        # it is never added.  inv_b = 1/true-batch; zero-padded batch rows
        # contribute 0 to both sums, so the statistics stay exact.
        mean = jnp.sum(h, axis=0, keepdims=True) * inv_b     # (1, th)
        ex2 = jnp.sum(h * h, axis=0, keepdims=True) * inv_b
        var = jnp.maximum(ex2 - mean * mean, 0.0)
        scale = gb_ref[0:1, :] * jax.lax.rsqrt(var + BN_EPS)
        shift = gb_ref[1:2, :] - mean * scale

        r = jnp.maximum(h * scale + shift, 0.0)              # BN + ReLU

        # Matmul-2 partial product straight into the resident output block.
        o_ref[...] += jnp.dot(r.astype(w2_ref.dtype), w2_ref[...],
                              preferred_element_type=jnp.float32)

        @pl.when(j == nj - 1)
        def _finalize():
            y = o_ref[...]                                   # (B, D_out) f32
            ss = jnp.sum(y * y, axis=1, keepdims=True)
            # One EUP rsqrt instead of sqrt + reciprocal; matches
            # y / max(||y||, eps) exactly since sqrt is monotone.
            o_ref[...] = y * jax.lax.rsqrt(jnp.maximum(ss, NORM_EPS * NORM_EPS))


def _pick_tile(dim, preferred):
    """Largest of {preferred, 512, 256, 128} dividing `dim`, else the full dim."""
    if dim <= preferred:
        return dim
    for t in (preferred, 512, 256, 128):
        if t <= dim and dim % t == 0:
            return t
    return dim


def _vmem_limit_bytes():
    # 3/4 of physical VMEM: ~96 MiB on v5e/v6e (128 MiB), ~48 MiB on v7x (64 MiB).
    try:
        cap = getattr(pltpu.get_tpu_info(), "vmem_capacity_bytes", None)
        if cap:
            return (int(cap) * 3) // 4
    except Exception:
        pass
    return 48 * 1024 * 1024


def prepare_projection_params(w1, b1, gamma, beta, w2, *,
                              compute_dtype=jnp.bfloat16):
    """One-time parameter prep, hoisted out of the per-call path.

    * W1/W2 cast to bf16 once (MXU-native; halves weight DMA).
    * gamma/beta packed into a single (2, H) f32 operand (fewer tiny DMAs).
    * b1 dropped: mathematically a no-op under train-mode BatchNorm.
    """
    del b1
    gb = jnp.concatenate(
        [jnp.reshape(gamma, (1, -1)), jnp.reshape(beta, (1, -1))],
        axis=0).astype(jnp.float32)
    return w1.astype(compute_dtype), gb, w2.astype(compute_dtype)


def projection(x, w1_c, gb, w2_c, *, tile_din=1024, tile_hid=512):
    """x:(B,D_in) f32, w1_c:(D_in,H), gb:(2,H) f32, w2_c:(H,D_out) -> (B,D_out) f32."""
    B, D_in = x.shape
    K2, H = w1_c.shape
    H2, D_out = w2_c.shape
    assert K2 == D_in and H2 == H and gb.shape == (2, H)

    compute_dtype = w1_c.dtype
    itemsize = jnp.dtype(compute_dtype).itemsize

    tk = _pick_tile(D_in, tile_din)
    th = _pick_tile(H, tile_hid)
    nk = D_in // tk
    nj = H // th

    # Pad the batch to a sublane multiple (bf16 packs 16 rows / vreg, f32 8).
    sub = 16 if itemsize == 2 else 8
    B_pad = max(sub, ((B + sub - 1) // sub) * sub)
    x_c = x.astype(compute_dtype)
    if B_pad != B:
        x_c = jnp.pad(x_c, ((0, B_pad - B), (0, 0)))   # zero rows: BN-stat safe

    vmem_limit = _vmem_limit_bytes()

    # W2's block index only changes when j increments, so its DMA normally has
    # exactly one (heavy) grid step to hide under; a third buffer lets it start
    # one step earlier.  Only worth the VMEM when there are several j tiles.
    w2_idx = lambda j, k: (j, 0)
    w2_bufs = 2
    w2_spec = pl.BlockSpec((th, D_out), w2_idx)
    if nj >= 3 and hasattr(pl, "Buffered"):
        try:
            w2_spec = pl.BlockSpec((th, D_out), w2_idx,
                                   pipeline_mode=pl.Buffered(3))
            w2_bufs = 3
        except TypeError:
            pass

    # Loud VMEM budget check (conservatively 2x-buffer every managed block).
    resident = (2 * B_pad * D_in * itemsize         # resident x
                + 2 * tk * th * itemsize            # W1 tiles
                + w2_bufs * th * D_out * itemsize   # W2 tiles
                + 2 * 2 * th * 4                    # packed gamma/beta
                + B_pad * th * 4                    # h_acc scratch
                + 2 * B_pad * D_out * 4)            # resident output block
    if resident > int(0.9 * vmem_limit):
        raise ValueError(
            f"Projection tiles do not fit VMEM: need ~{resident >> 20} MiB, "
            f"limit {vmem_limit >> 20} MiB; reduce tile_hid/tile_din or batch.")

    kernel = functools.partial(_projection_kernel, inv_b=1.0 / B, tk=tk)

    out = pl.pallas_call(
        kernel,
        out_shape=jax.ShapeDtypeStruct((B_pad, D_out), jnp.float32),
        grid_spec=pltpu.PrefetchScalarGridSpec(
            num_scalar_prefetch=0,
            grid=(nj, nk),                                   # (H tiles, D_in tiles)
            in_specs=[
                # x fetched from HBM once; sliced per k inside the kernel.
                pl.BlockSpec((B_pad, D_in), lambda j, k: (0, 0)),
                pl.BlockSpec((tk, th), lambda j, k: (k, j)),     # W1
                pl.BlockSpec((2, th), lambda j, k: (0, j)),      # gamma/beta
                w2_spec,                                         # W2
            ],
            # Lane-dense, constant-index output block: VMEM-resident
            # accumulator, written back to HBM once.
            out_specs=pl.BlockSpec((B_pad, D_out), lambda j, k: (0, 0)),
            scratch_shapes=[pltpu.VMEM((B_pad, th), jnp.float32)],
        ),
        compiler_params=pltpu.CompilerParams(
            # Both axes are reductions (h_acc over k, output over j).
            dimension_semantics=("arbitrary", "arbitrary"),
            vmem_limit_bytes=vmem_limit,
        ),
    )(x_c, w1_c, gb, w2_c)

    return out[:B] if B_pad != B else out


def projection_ref(x, w1, b1, gamma, beta, w2):
    h = x @ w1 + b1
    mean = jnp.mean(h, axis=0, keepdims=True)
    var = jnp.mean((h - mean) ** 2, axis=0, keepdims=True)
    hn = (h - mean) / jnp.sqrt(var + BN_EPS) * gamma + beta
    r = jnp.maximum(hn, 0.0)
    y = r @ w2
    nrm = jnp.sqrt(jnp.sum(y * y, axis=1, keepdims=True))
    return y / jnp.maximum(nrm, NORM_EPS)


if __name__ == "__main__":
    # Small shapes consistent with the module (input_dim -> hidden_dim -> output_dim).
    B, D_IN, HID, D_OUT = 16, 256, 256, 128

    key = jax.random.PRNGKey(0)
    kx, kw1, kb1, kg, kb, kw2 = jax.random.split(key, 6)

    x = jax.random.normal(kx, (B, D_IN), dtype=jnp.float32)

    lim1 = 1.0 / (D_IN ** 0.5)
    w1 = jax.random.uniform(kw1, (D_IN, HID), minval=-lim1, maxval=lim1,
                            dtype=jnp.float32)
    b1 = jax.random.uniform(kb1, (1, HID), minval=-lim1, maxval=lim1,
                            dtype=jnp.float32)
    # Non-trivial BN affine params to exercise the scale/shift math.
    gamma = jax.random.uniform(kg, (1, HID), minval=0.5, maxval=1.5,
                               dtype=jnp.float32)
    beta = 0.1 * jax.random.normal(kb, (1, HID), dtype=jnp.float32)
    lim2 = 1.0 / (HID ** 0.5)
    w2 = jax.random.uniform(kw2, (HID, D_OUT), minval=-lim2, maxval=lim2,
                            dtype=jnp.float32)

    ref = projection_ref(x, w1, b1, gamma, beta, w2)

    # f32 matmul path (exact module math); small tiles exercise the (j, k) grid.
    p_f32 = prepare_projection_params(w1, b1, gamma, beta, w2,
                                      compute_dtype=jnp.float32)
    out_f32 = jax.block_until_ready(
        projection(x, *p_f32, tile_din=128, tile_hid=128))
    assert out_f32.shape == (B, D_OUT)
    assert jnp.allclose(out_f32, ref, atol=1e-4, rtol=1e-4)

    # Default bf16 matmul path (f32 accumulation / BN / L2-norm); B=12 also
    # exercises the zero-row batch padding (12 -> 16 sublanes).
    Bs = 12
    p_bf16 = prepare_projection_params(w1, b1, gamma, beta, w2)
    ref_s = projection_ref(x[:Bs], w1, b1, gamma, beta, w2)
    out_bf16 = jax.block_until_ready(
        projection(x[:Bs], *p_bf16, tile_din=128, tile_hid=128))
    assert out_bf16.shape == (Bs, D_OUT)
    assert float(jnp.max(jnp.abs(out_bf16 - ref_s))) < 5e-2

    print("KERNEL_OK")
</pallas_src>

<mosaic_0001>
module attributes {stable_mosaic.version = 11 : i64} {
  func.func @_projection_kernel(%arg0: i32, %arg1: i32, %arg2: memref<16x256xf32, #tpu.memory_space<vmem>>, %arg3: memref<128x128xf32, #tpu.memory_space<vmem>>, %arg4: memref<2x128xf32, #tpu.memory_space<vmem>>, %arg5: memref<128x128xf32, #tpu.memory_space<vmem>>, %arg6: memref<16x128xf32, #tpu.memory_space<vmem>>, %arg7: memref<16x128xf32, #tpu.memory_space<vmem>>) attributes {dimension_semantics = [#tpu.dimension_semantics<arbitrary>, #tpu.dimension_semantics<arbitrary>], iteration_bounds = array<i64: 2, 2>, scalar_prefetch = 0 : i64, scratch_operands = 1 : i64, tpu.core_type = #tpu.core_type<tc>, window_params = [{pipeline_mode = #tpu.pipeline_mode<synchronous>, transform_indices = @transform_0, window_bounds = array<i64: 16, 256>}, {transform_indices = @transform_1, window_bounds = array<i64: 128, 128>}, {transform_indices = @transform_2, window_bounds = array<i64: 2, 128>}, {transform_indices = @transform_3, window_bounds = array<i64: 128, 128>}, {pipeline_mode = #tpu.pipeline_mode<synchronous>, transform_indices = @transform_4, window_bounds = array<i64: 16, 128>}]} {
    %c0_i32 = arith.constant 0 : i32
    %0 = arith.cmpi eq, %arg0, %c0_i32 : i32
    %c0_i32_0 = arith.constant 0 : i32
    %1 = arith.cmpi eq, %arg1, %c0_i32_0 : i32
    %2 = arith.andi %0, %1 : i1
    %3 = arith.extui %2 : i1 to i32
    %c0_i32_1 = arith.constant 0 : i32
    %4 = arith.cmpi ne, %3, %c0_i32_1 : i32
    scf.if %4 {
      %cst_11 = arith.constant 0.000000e+00 : f32
      %20 = vector.broadcast %cst_11 : f32 to vector<16x128xf32>
      %c0_12 = arith.constant 0 : index
      %c0_13 = arith.constant 0 : index
      %21 = vector.load %arg6[%c0_12, %c0_13] : memref<16x128xf32, #tpu.memory_space<vmem>>, vector<16x128xf32>
      tpu.vector_store %arg6[%c0_12, %c0_13], %20 {strides = array<i32>} : memref<16x128xf32, #tpu.memory_space<vmem>>, vector<16x128xf32>,
    } else {
    }
    %c0_i32_2 = arith.constant 0 : i32
    %5 = arith.cmpi eq, %arg1, %c0_i32_2 : i32
    %6 = arith.extui %5 : i1 to i32
    %c0_i32_3 = arith.constant 0 : i32
    %7 = arith.cmpi ne, %6, %c0_i32_3 : i32
    scf.if %7 {
      %cst_11 = arith.constant 0.000000e+00 : f32
      %20 = vector.broadcast %cst_11 : f32 to vector<16x128xf32>
      %c0_12 = arith.constant 0 : index
      %c0_13 = arith.constant 0 : index
      %21 = vector.load %arg7[%c0_12, %c0_13] : memref<16x128xf32, #tpu.memory_space<vmem>>, vector<16x128xf32>
      tpu.vector_store %arg7[%c0_12, %c0_13], %20 {strides = array<i32>} : memref<16x128xf32, #tpu.memory_space<vmem>>, vector<16x128xf32>,
    } else {
    }
    %c128_i32 = arith.constant 128 : i32
    %8 = arith.muli %arg1, %c128_i32 : i32
    %9 = tpu.assume_multiple %8, 128 : i32
    %c0 = arith.constant 0 : index
    %c0_4 = arith.constant 0 : index
    %10 = vector.load %arg7[%c0, %c0_4] : memref<16x128xf32, #tpu.memory_space<vmem>>, vector<16x128xf32>
    %c0_5 = arith.constant 0 : index
    %11 = arith.index_cast %9 : i32 to index
    %12 = vector.load %arg2[%c0_5, %11] : memref<16x256xf32, #tpu.memory_space<vmem>>, vector<16x128xf32>
    %c0_6 = arith.constant 0 : index
    %c0_7 = arith.constant 0 : index
    %13 = vector.load %arg3[%c0_6, %c0_7] : memref<128x128xf32, #tpu.memory_space<vmem>>, vector<128x128xf32>
    %cst = arith.constant dense<0.000000e+00> : vector<16x128xf32>
    %14 = tpu.matmul %12, %13, %cst {dimension_numbers = #tpu.dot_dimension_numbers<[1], [0], [0], [1], [0, 0, 1, 1], [], []>} : vector<16x128xf32>, vector<128x128xf32>, vector<16x128xf32> -> vector<16x128xf32>
    %15 = arith.addf %10, %14 : vector<16x128xf32>
    %c0_8 = arith.constant 0 : index
    %c0_9 = arith.constant 0 : index
    %16 = vector.load %arg7[%c0_8, %c0_9] : memref<16x128xf32, #tpu.memory_space<vmem>>, vector<16x128xf32>
    tpu.vector_store %arg7[%c0_8, %c0_9], %15 {strides = array<i32>} : memref<16x128xf32, #tpu.memory_space<vmem>>, vector<16x128xf32>,
    %c1_i32 = arith.constant 1 : i32
    %17 = arith.cmpi eq, %arg1, %c1_i32 : i32
    %18 = arith.extui %17 : i1 to i32
    %c0_i32_10 = arith.constant 0 : i32
    %19 = arith.cmpi ne, %18, %c0_i32_10 : i32
    scf.if %19 {
      %c0_11 = arith.constant 0 : index
      %c0_12 = arith.constant 0 : index
      %20 = vector.load %arg7[%c0_11, %c0_12] : memref<16x128xf32, #tpu.memory_space<vmem>>, vector<16x128xf32>
      %cst_13 = arith.constant dense<0.000000e+00> : vector<128xf32>
      %21 = vector.multi_reduction <add>, %20, %cst_13 [0] : vector<16x128xf32> to vector<128xf32>
      %22 = vector.shape_cast %21 : vector<128xf32> to vector<1x128xf32>
      %cst_14 = arith.constant 6.250000e-02 : f32
      %23 = vector.broadcast %cst_14 : f32 to vector<1x128xf32>
      %24 = arith.mulf %22, %23 : vector<1x128xf32>
      %25 = arith.mulf %20, %20 : vector<16x128xf32>
      %cst_15 = arith.constant dense<0.000000e+00> : vector<128xf32>
      %26 = vector.multi_reduction <add>, %25, %cst_15 [0] : vector<16x128xf32> to vector<128xf32>
      %27 = vector.shape_cast %26 : vector<128xf32> to vector<1x128xf32>
      %cst_16 = arith.constant 6.250000e-02 : f32
      %28 = vector.broadcast %cst_16 : f32 to vector<1x128xf32>
      %29 = arith.mulf %27, %28 : vector<1x128xf32>
      %30 = arith.mulf %24, %24 : vector<1x128xf32>
      %31 = arith.subf %29, %30 : vector<1x128xf32>
      %cst_17 = arith.constant 0.000000e+00 : f32
      %32 = vector.broadcast %cst_17 : f32 to vector<1x128xf32>
      %33 = arith.maximumf %31, %32 : vector<1x128xf32>
      %c0_18 = arith.constant 0 : index
      %c0_19 = arith.constant 0 : index
      %34 = vector.load %arg4[%c0_18, %c0_19] : memref<2x128xf32, #tpu.memory_space<vmem>>, vector<1x128xf32>
      %cst_20 = arith.constant 9.99999974E-6 : f32
      %35 = vector.broadcast %cst_20 : f32 to vector<1x128xf32>
      %36 = arith.addf %33, %35 : vector<1x128xf32>
      %37 = math.rsqrt %36 : vector<1x128xf32>
      %38 = arith.mulf %34, %37 : vector<1x128xf32>
      %c1 = arith.constant 1 : index
      %c0_21 = arith.constant 0 : index
      %39 = vector.load %arg4[%c1, %c0_21] : memref<2x128xf32, #tpu.memory_space<vmem>>, vector<1x128xf32>
      %40 = arith.mulf %24, %38 : vector<1x128xf32>
      %41 = arith.subf %39, %40 : vector<1x128xf32>
      %42 = vector.broadcast %38 : vector<1x128xf32> to vector<16x128xf32>
      %43 = arith.mulf %20, %42 : vector<16x128xf32>
      %44 = vector.broadcast %41 : vector<1x128xf32> to vector<16x128xf32>
      %45 = arith.addf %43, %44 : vector<16x128xf32>
      %cst_22 = arith.constant 0.000000e+00 : f32
      %46 = vector.broadcast %cst_22 : f32 to vector<16x128xf32>
      %47 = arith.maximumf %45, %46 : vector<16x128xf32>
      %c0_23 = arith.constant 0 : index
      %c0_24 = arith.constant 0 : index
      %48 = vector.load %arg6[%c0_23, %c0_24] : memref<16x128xf32, #tpu.memory_space<vmem>>, vector<16x128xf32>
      %c0_25 = arith.constant 0 : index
      %c0_26 = arith.constant 0 : index
      %49 = vector.load %arg5[%c0_25, %c0_26] : memref<128x128xf32, #tpu.memory_space<vmem>>, vector<128x128xf32>
      %cst_27 = arith.constant dense<0.000000e+00> : vector<16x128xf32>
      %50 = tpu.matmul %47, %49, %cst_27 {dimension_numbers = #tpu.dot_dimension_numbers<[1], [0], [0], [1], [0, 0, 1, 1], [], []>} : vector<16x128xf32>, vector<128x128xf32>, vector<16x128xf32> -> vector<16x128xf32>
      %51 = arith.addf %48, %50 : vector<16x128xf32>
      %c0_28 = arith.constant 0 : index
      %c0_29 = arith.constant 0 : index
      %52 = vector.load %arg6[%c0_28, %c0_29] : memref<16x128xf32, #tpu.memory_space<vmem>>, vector<16x128xf32>
      tpu.vector_store %arg6[%c0_28, %c0_29], %51 {strides = array<i32>} : memref<16x128xf32, #tpu.memory_space<vmem>>, vector<16x128xf32>,
      %c1_i32_30 = arith.constant 1 : i32
      %53 = arith.cmpi eq, %arg0, %c1_i32_30 : i32
      %54 = arith.extui %53 : i1 to i32
      %c0_i32_31 = arith.constant 0 : i32
      %55 = arith.cmpi ne, %54, %c0_i32_31 : i32
      scf.if %55 {
        %c0_32 = arith.constant 0 : index
        %c0_33 = arith.constant 0 : index
        %56 = vector.load %arg6[%c0_32, %c0_33] : memref<16x128xf32, #tpu.memory_space<vmem>>, vector<16x128xf32>
        %57 = arith.mulf %56, %56 : vector<16x128xf32>
        %cst_34 = arith.constant dense<0.000000e+00> : vector<16xf32>
        %58 = vector.multi_reduction <add>, %57, %cst_34 [1] : vector<16x128xf32> to vector<16xf32>
        %59 = vector.shape_cast %58 : vector<16xf32> to vector<16x1xf32>
        %cst_35 = arith.constant 1.000000e-24 : f32
        %60 = vector.broadcast %cst_35 : f32 to vector<16x1xf32>
        %61 = arith.maximumf %59, %60 : vector<16x1xf32>
        %62 = math.rsqrt %61 : vector<16x1xf32>
        %63 = vector.broadcast %62 : vector<16x1xf32> to vector<16x128xf32>
        %64 = arith.mulf %56, %63 : vector<16x128xf32>
        %c0_36 = arith.constant 0 : index
        %c0_37 = arith.constant 0 : index
        %65 = vector.load %arg6[%c0_36, %c0_37] : memref<16x128xf32, #tpu.memory_space<vmem>>, vector<16x128xf32>
        tpu.vector_store %arg6[%c0_36, %c0_37], %64 {strides = array<i32>} : memref<16x128xf32, #tpu.memory_space<vmem>>, vector<16x128xf32>,
      } else {
      }
    } else {
    }
    return
  }
  func.func @transform_0(%arg0: i32, %arg1: i32) -> (i32, i32) {
    %c0_i32 = arith.constant 0 : i32
    %c0_i32_0 = arith.constant 0 : i32
    %c0_i32_1 = arith.constant 0 : i32
    return %c0_i32, %c0_i32_0 : i32, i32
  }
  func.func @transform_1(%arg0: i32, %arg1: i32) -> (i32, i32) {
    %c0_i32 = arith.constant 0 : i32
    return %arg1, %arg0 : i32, i32
  }
  func.func @transform_2(%arg0: i32, %arg1: i32) -> (i32, i32) {
    %c0_i32 = arith.constant 0 : i32
    %c0_i32_0 = arith.constant 0 : i32
    return %c0_i32, %arg0 : i32, i32
  }
  func.func @transform_3(%arg0: i32, %arg1: i32) -> (i32, i32) {
    %c0_i32 = arith.constant 0 : i32
    %c0_i32_0 = arith.constant 0 : i32
    return %arg0, %c0_i32 : i32, i32
  }
  func.func @transform_4(%arg0: i32, %arg1: i32) -> (i32, i32) {
    %c0_i32 = arith.constant 0 : i32
    %c0_i32_0 = arith.constant 0 : i32
    %c0_i32_1 = arith.constant 0 : i32
    return %c0_i32, %c0_i32_0 : i32, i32
  }
}

</mosaic_0001>

<llo_original>
// kernel: tpu_custom_call.1
$region0: #{tpu_custom_call.1}
  #allocation0 [shape = 'u32[]', space=smem, size = 0x4, offset = 0x4, fixed_abs, tag = 'smem constant byte address 0x4 - core index']
  #allocation1 [shape = 'u32[144,128]{1,0:T(1,128)}', space=vmem, size = 0x12000, scoped, tag = 'internal scratch']
  #allocation2 [shape = 'f32[16,128]{1,0:T(8,128)}', space=vmem, size = 0x2000, scoped, tag = 'scratch operand']
  %s0 = inlined_call_operand.hbm [shape: f32[16,256], index: 0, kind: input, shape index: {}]
  %s1 = inlined_call_operand.hbm [shape: f32[256,256], index: 1, kind: input, shape index: {}]
  %s2 = inlined_call_operand.vmem [shape: f32[2,256], index: 2, kind: input, shape index: {}]
  %s3 = inlined_call_operand.hbm [shape: f32[256,128], index: 3, kind: input, shape index: {}]
  %s4 = inlined_call_operand.hbm [shape: f32[16,128], index: 4, kind: output, shape index: {}]
  %s5 = sld [smem:[#allocation0]]
  $region77: #{tpu_custom_call.1} parent=0
    _
  %s7 = ssub.s32 1, %s5
  %s8 = scalar_select 0, %s7, %s5
  $region1: #{tpu_custom_call.1} parent=0
    #allocation3 [shape = 'u8[16384]{0}', space=vmem, size = 0x4000, scoped, tag = 'input window, operand 0, single buffered']
    #allocation4 [shape = 's32[2]{0}', space=sflag, size = 0x8, scoped, tag = 'scoped memory for tpu_custom_call.1']
    #allocation5 [shape = 's32[2]{0}', space=sflag, size = 0x8, scoped, tag = 'scoped memory for tpu_custom_call.1']
    #allocation6 [shape = 'u8[131072]{0}', space=vmem, size = 0x20000, scoped, tag = 'input window, operand 1']
    #allocation7 [shape = 's32[2]{0}', space=sflag, size = 0x8, scoped, tag = 'scoped memory for tpu_custom_call.1']
    #allocation8 [shape = 'u8[131072]{0}', space=vmem, size = 0x20000, scoped, tag = 'input window, operand 3']
    #allocation9 [shape = 'u8[8192]{0}', space=vmem, size = 0x2000, scoped, tag = 'output window, operand 0, single buffered']
    %9 = vsyncpa [#allocation4], 0
    %10 = vsyncpa [#allocation7], 0
    %s11 = scalar_lea.sflag [#allocation7], 1
    %12 = vsyncpa %s11, 0
    %13 = vsyncpa [#allocation5], 0
    loop: start=0, step=1, limit=6
    $region2: #{tpu_custom_call.1} parent=1 // loop_pre_header
      _
    $region3: #{tpu_custom_call.1} parent=1 // loop_header
      %s15 = sphi 0, %s19
      %p16 = scmp.ge.s32.totalorder %s15, 6
      %s22 = sphi 0, %s34
      %s23 = sphi 0, %s30
      %s24 = sphi 0, %s22
      %s25 = sphi 0, %s23
      %s26 = sphi 0, %s24
      %s27 = sphi 0, %s25
      %s35 = sphi 0, %s35
      %s37 = sphi 0, %s35
      %s38 = sphi 0, %s37
      %s52 = sphi 0, %s38
      %s60 = sphi 0, %s62
      %s63 = sphi 0, %s60
      %s64 = sphi 0, %s63
      %s80 = sphi 0, %s64
      %s86 = sphi 0, %s88
      %s89 = sphi 0, %s86
      %s90 = sphi 0, %s89
      %s106 = sphi 0, %s90
      %s112 = sphi 0, %s114
      %s115 = sphi 0, %s112
      %s116 = sphi 0, %s115
      %s132 = sphi 0, %s116
      %s136 = sphi 0, %s136
      %s138 = sphi 0, %s136
      %s139 = sphi 0, %s138
      %s153 = sphi 0, %s139
    $region4: #{tpu_custom_call.1} parent=1 // loop_header_branch
      %18 = sbr.rel (%p16) target = $region8
    $region5: #{tpu_custom_call.1} parent=1 // loop_body
      %s20 = ssub.s32 %s15, 1
      %s21 = ssub.s32 %s15, 2
      %s28 = sadd.s32 1, %s23
      %p29 = scmp.ge.s32.totalorder %s28, 2
      %s30 = scalar_select %p29, 0, %s28
      %s31 = sadd.s32 1, %s22
      %s32 = scalar_select %p29, %s31, %s22
      %p33 = scmp.ge.s32.totalorder %s32, 2
      %s34 = scalar_select %p33, 0, %s32
      %s36 = sadd.s32 %s35, 1
      %p39 = scmp.eq.s32.totalorder %s15, 3
      %p40 = scmp.ne.s32.totalorder %s35, %s37
      %p41 = scmp.eq.s32.totalorder %s15, 0
      %p42 = por %p40, %p41
      %p43 = scmp.ne.s32.totalorder %s35, %s37
      %p44 = scmp.eq.s32.totalorder %s20, 3
      %p45 = por %p43, %p44
      %p46 = scmp.ne.s32.totalorder %s37, %s38
      %p47 = scmp.eq.s32.totalorder %s20, 0
      %p48 = por %p46, %p47
      %p49 = scmp.ne.s32.totalorder %s37, %s38
      %p50 = scmp.eq.s32.totalorder %s21, 3
      %p51 = por %p49, %p50
      %p53 = scmp.ne.s32.totalorder %s38, %s52
      %p54 = scmp.eq.s32.totalorder %s21, 0
      %p55 = por %p53, %p54
      %s56 = ssub.s32 %s23, %s30
      %s57 = ssub.s32 %s22, %s34
      %s58 = sor.u32 %s56, %s57
      %p59 = scmp.eq.s32.totalorder %s58, 0
      %s61 = sadd.s32 %s60, 1
      %s62 = scalar_select %p59, %s60, %s61
      %p65 = pneg %p59
      %p66 = scmp.eq.s32.totalorder %s15, 3
      %p67 = por %p65, %p66
      %p68 = scmp.ne.s32.totalorder %s60, %s63
      %p69 = scmp.eq.s32.totalorder %s15, 0
      %p70 = por %p68, %p69
      %p71 = scmp.ne.s32.totalorder %s60, %s63
      %p72 = scmp.eq.s32.totalorder %s20, 3
      %p73 = por %p71, %p72
      %p74 = scmp.ne.s32.totalorder %s63, %s64
      %p75 = scmp.eq.s32.totalorder %s20, 0
      %p76 = por %p74, %p75
      %p77 = scmp.ne.s32.totalorder %s63, %s64
      %p78 = scmp.eq.s32.totalorder %s21, 3
      %p79 = por %p77, %p78
      %p81 = scmp.ne.s32.totalorder %s64, %s80
      %p82 = scmp.eq.s32.totalorder %s21, 0
      %p83 = por %p81, %p82
      %s84 = ssub.s32 %s22, %s34
      %p85 = scmp.eq.s32.totalorder %s84, 0
      %s87 = sadd.s32 %s86, 1
      %s88 = scalar_select %p85, %s86, %s87
      %p91 = pneg %p85
      %p92 = scmp.eq.s32.totalorder %s15, 3
      %p93 = por %p91, %p92
      %p94 = scmp.ne.s32.totalorder %s86, %s89
      %p95 = scmp.eq.s32.totalorder %s15, 0
      %p96 = por %p94, %p95
      %p97 = scmp.ne.s32.totalorder %s86, %s89
      %p98 = scmp.eq.s32.totalorder %s20, 3
      %p99 = por %p97, %p98
      %p100 = scmp.ne.s32.totalorder %s89, %s90
      %p101 = scmp.eq.s32.totalorder %s20, 0
      %p102 = por %p100, %p101
      %p103 = scmp.ne.s32.totalorder %s89, %s90
      %p104 = scmp.eq.s32.totalorder %s21, 3
      %p105 = por %p103, %p104
      %p107 = scmp.ne.s32.totalorder %s90, %s106
      %p108 = scmp.eq.s32.totalorder %s21, 0
      %p109 = por %p107, %p108
      %s110 = ssub.s32 %s22, %s34
      %p111 = scmp.eq.s32.totalorder %s110, 0
      %s113 = sadd.s32 %s112, 1
      %s114 = scalar_select %p111, %s112, %s113
      %p117 = pneg %p111
      %p118 = scmp.eq.s32.totalorder %s15, 3
      %p119 = por %p117, %p118
      %p120 = scmp.ne.s32.totalorder %s112, %s115
      %p121 = scmp.eq.s32.totalorder %s15, 0
      %p122 = por %p120, %p121
      %p123 = scmp.ne.s32.totalorder %s112, %s115
      %p124 = scmp.eq.s32.totalorder %s20, 3
      %p125 = por %p123, %p124
      %p126 = scmp.ne.s32.totalorder %s115, %s116
      %p127 = scmp.eq.s32.totalorder %s20, 0
      %p128 = por %p126, %p127
      %p129 = scmp.ne.s32.totalorder %s115, %s116
      %p130 = scmp.eq.s32.totalorder %s21, 3
      %p131 = por %p129, %p130
      %p133 = scmp.ne.s32.totalorder %s116, %s132
      %p134 = scmp.eq.s32.totalorder %s21, 0
      %p135 = por %p133, %p134
      %s137 = sadd.s32 %s136, 1
      %p140 = scmp.eq.s32.totalorder %s15, 3
      %p141 = scmp.ne.s32.totalorder %s136, %s138
      %p142 = scmp.eq.s32.totalorder %s15, 0
      %p143 = por %p141, %p142
      %p144 = scmp.ne.s32.totalorder %s136, %s138
      %p145 = scmp.eq.s32.totalorder %s20, 3
      %p146 = por %p144, %p145
      %p147 = scmp.ne.s32.totalorder %s138, %s139
      %p148 = scmp.eq.s32.totalorder %s20, 0
      %p149 = por %p147, %p148
      %p150 = scmp.ne.s32.totalorder %s138, %s139
      %p151 = scmp.eq.s32.totalorder %s21, 3
      %p152 = por %p150, %p151
      %p154 = scmp.ne.s32.totalorder %s139, %s153
      %p155 = scmp.eq.s32.totalorder %s21, 0
      %p156 = por %p154, %p155
      %p157 = scmp.le.s32.totalorder 1, %s15
      %p158 = scmp.lt.s32.totalorder %s15, 5
      %p159 = pnand %p157, %p158
      %p160 = pneg %p159
      // Predicated region
      $region9: #{tpu_custom_call.1} parent=5 // pred_check
        _
      $region10: #{tpu_custom_call.1} parent=5 // pred_check_branch
        %162 = sbr.rel (%p159) target = $region12
      $region11: #{tpu_custom_call.1} parent=5 // pred_region
        %s163 = ssub.s32 %s15, 1
        // Predicated region
        $region13: #{tpu_custom_call.1} parent=11 // pred_check
          %p164 = pneg %p48
        $region14: #{tpu_custom_call.1} parent=11 // pred_check_branch
          %166 = sbr.rel (%p164) target = $region16
        $region15: #{tpu_custom_call.1} parent=11 // pred_region
          %s168 = ssub.s32 512, 512
          %169 = vsyncadd [#allocation4], %s168
          %s170 = sshll.u32 [#allocation3], 4
          %s171 = int_to_ptr.vmem [resolvable:$true] %s170
          %176 = dma.hbm_to_vmem [thread:$0]  %s0, 512, %s171, [#allocation4], 256, 256, 16
        $region16: #{tpu_custom_call.1} parent=11 // pred_fallthru
          _
      $region12: #{tpu_custom_call.1} parent=5 // pred_fallthru
        _
      %p177 = scmp.lt.s32.totalorder %s15, 4
      // Predicated region
      $region17: #{tpu_custom_call.1} parent=5 // pred_check
        %p178 = pneg %p177
      $region18: #{tpu_custom_call.1} parent=5 // pred_check_branch
        %180 = sbr.rel (%p178) target = $region20
      $region19: #{tpu_custom_call.1} parent=5 // pred_region
        // Predicated region
        $region21: #{tpu_custom_call.1} parent=19 // pred_check
          %p181 = pneg %p70
        $region22: #{tpu_custom_call.1} parent=19 // pred_check_branch
          %183 = sbr.rel (%p181) target = $region24
        $region23: #{tpu_custom_call.1} parent=19 // pred_region
          %s184 = sand.u32 %s15, 1
          %s185 = scalar_lea.sflag [#allocation7], %s184
          %s186 = sand.u32 %s60, 1
          %s187 = smul.addr %s186, 128
          %s188 = scalar_lea.vmem [#allocation6], %s187
          %s189 = smul.u32 16, %s23
          %s191 = ssub.s32 2048, 2048
          %192 = vsyncadd %s185, %s191
          %s193 = smul.addr %s189, 2
          %s194 = sadd.s32 %s22, %s193
          %s195 = smul.addr %s194, 128
          %s196 = scalar_lea.hbm %s1, %s195
          %s197 = sshll.u32 %s188, 4
          %s198 = int_to_ptr.vmem [resolvable:$true] %s197
          %203 = dma.hbm_to_vmem [thread:$0]  %s196, 2048, %s198, %s185, 256, 128, 8
        $region24: #{tpu_custom_call.1} parent=19 // pred_fallthru
          _
        // Predicated region
        $region25: #{tpu_custom_call.1} parent=19 // pred_check
          %p204 = pneg %p96
        $region26: #{tpu_custom_call.1} parent=19 // pred_check_branch
          %206 = sbr.rel (%p204) target = $region28
        $region27: #{tpu_custom_call.1} parent=19 // pred_region
          %p207 = scmp.lt.s32.totalorder %s22, 1
          %s208 = scalar_select %p207, %s22, 1
          %s209 = smul.addr %s208, 2
          %s210 = scalar_lea.vmem %s2, %s209
        $region28: #{tpu_custom_call.1} parent=19 // pred_fallthru
          _
        // Predicated region
        $region29: #{tpu_custom_call.1} parent=19 // pred_check
          %p211 = pneg %p122
        $region30: #{tpu_custom_call.1} parent=19 // pred_check_branch
          %213 = sbr.rel (%p211) target = $region32
        $region31: #{tpu_custom_call.1} parent=19 // pred_region
          %s214 = sand.u32 %s15, 1
          %s215 = scalar_lea.sflag [#allocation7], %s214
          %s216 = sand.u32 %s112, 1
          %s217 = smul.addr %s216, 128
          %s218 = scalar_lea.vmem [#allocation8], %s217
          %s219 = smul.u32 16, %s22
          %s221 = ssub.s32 2048, 2048
          %222 = vsyncadd %s215, %s221
          %s223 = smul.addr %s219, 128
          %s224 = scalar_lea.hbm %s3, %s223
          %s225 = sshll.u32 %s218, 4
          %s226 = int_to_ptr.vmem [resolvable:$true] %s225
          %231 = dma.hbm_to_vmem [thread:$0]  %s224, 2048, %s226, %s215, 128, 128, 8
        $region32: #{tpu_custom_call.1} parent=19 // pred_fallthru
          _
      $region20: #{tpu_custom_call.1} parent=5 // pred_fallthru
        _
      %p232 = scmp.le.s32.totalorder 1, %s15
      %p233 = scmp.lt.s32.totalorder %s15, 5
      %p234 = pnand %p232, %p233
      %p235 = pneg %p234
      // Predicated region
      $region33: #{tpu_custom_call.1} parent=5 // pred_check
        _
      $region34: #{tpu_custom_call.1} parent=5 // pred_check_branch
        %237 = sbr.rel (%p234) target = $region36
      $region35: #{tpu_custom_call.1} parent=5 // pred_region
        %s238 = ssub.s32 %s15, 1
        // Predicated region
        $region37: #{tpu_custom_call.1} parent=35 // pred_check
          %p239 = pneg %p48
        $region38: #{tpu_custom_call.1} parent=35 // pred_check_branch
          %241 = sbr.rel (%p239) target = $region40
        $region39: #{tpu_custom_call.1} parent=35 // pred_region
          %242 = dma.done [#allocation4], 512
        $region40: #{tpu_custom_call.1} parent=35 // pred_fallthru
          _
        %s243 = sand.u32 %s20, 1
        %s244 = scalar_lea.sflag [#allocation7], %s243
        %s245 = sand.u32 %s63, 1
        %s246 = smul.addr %s245, 128
        %s247 = scalar_lea.vmem [#allocation6], %s246
        // Predicated region
        $region41: #{tpu_custom_call.1} parent=35 // pred_check
          %p248 = pneg %p76
        $region42: #{tpu_custom_call.1} parent=35 // pred_check_branch
          %250 = sbr.rel (%p248) target = $region44
        $region43: #{tpu_custom_call.1} parent=35 // pred_region
          %251 = dma.done %s244, 2048
        $region44: #{tpu_custom_call.1} parent=35 // pred_fallthru
          _
        %s252 = sand.u32 %s20, 1
        %s253 = scalar_lea.sflag [#allocation7], %s252
        %s254 = sand.u32 %s115, 1
        %s255 = smul.addr %s254, 128
        %s256 = scalar_lea.vmem [#allocation8], %s255
        // Predicated region
        $region45: #{tpu_custom_call.1} parent=35 // pred_check
          %p257 = pneg %p128
        $region46: #{tpu_custom_call.1} parent=35 // pred_check_branch
          %259 = sbr.rel (%p257) target = $region48
        $region47: #{tpu_custom_call.1} parent=35 // pred_region
          %260 = dma.done %s253, 2048
        $region48: #{tpu_custom_call.1} parent=35 // pred_fallthru
          _
        %p261 = pneg %p48
        %p262 = pneg %p45
        %s263 = sand.u32 %s20, 1
        %s264 = scalar_lea.sflag [#allocation7], %s263
        %s265 = sand.u32 %s63, 1
        %s266 = smul.addr %s265, 128
        %s267 = scalar_lea.vmem [#allocation6], %s266
        %p268 = pneg %p76
        %p269 = pneg %p73
        %p270 = scmp.lt.s32.totalorder %s24, 1
        %s271 = scalar_select %p270, %s24, 1
        %s272 = smul.addr %s271, 2
        %s273 = scalar_lea.vmem %s2, %s272
        %p274 = pneg %p102
        %p275 = pneg %p99
        %s276 = sand.u32 %s20, 1
        %s277 = scalar_lea.sflag [#allocation7], %s276
        %s278 = sand.u32 %s115, 1
        %s279 = smul.addr %s278, 128
        %s280 = scalar_lea.vmem [#allocation8], %s279
        %p281 = pneg %p128
        %p282 = pneg %p125
        %p283 = pneg %p149
        %p284 = pneg %p146
        %s285 = smul.u32 16, %s25
        %p286 = scmp.lt.s32.totalorder %s24, 1
        %s287 = scalar_select %p286, %s24, 1
        %s288 = smul.addr %s287, 2
        %s289 = scalar_lea.vmem %s2, %s288
        %s290 = smul.u32 16, %s24
        %p291 = scmp.eq.s32.totalorder %s24, 0
        %p292 = scmp.eq.s32.totalorder %s25, 0
        %p293 = pnand %p291, %p292
        %p294 = pneg %p293
        // Predicated region
        $region49: #{tpu_custom_call.1} parent=35 // pred_check
          _
        $region50: #{tpu_custom_call.1} parent=35 // pred_check_branch
          %296 = sbr.rel (%p293) target = $region52
        $region51: #{tpu_custom_call.1} parent=35 // pred_region
          %297 = vst [vmem:[#allocation9] sm:$0xff] 0.0
          %298 = vst [vmem:[#allocation9 + $0x8] sm:$0xff] 0.0
        $region52: #{tpu_custom_call.1} parent=35 // pred_fallthru
          _
        // Predicated region
        $region53: #{tpu_custom_call.1} parent=35 // pred_check
          %p299 = pneg %p292
        $region54: #{tpu_custom_call.1} parent=35 // pred_check_branch
          %301 = sbr.rel (%p299) target = $region56
        $region55: #{tpu_custom_call.1} parent=35 // pred_region
          %302 = vst [vmem:[#allocation2] sm:$0xff] 0.0
          %303 = vst [vmem:[#allocation2 + $0x8] sm:$0xff] 0.0
        $region56: #{tpu_custom_call.1} parent=35 // pred_fallthru
          _
        %s304 = smul.u32 %s25, 128
        %v305 = vld [vmem:[#allocation2] sm:$0xff]
        %v306 = vld [vmem:[#allocation2 + $0x8] sm:$0xff]
        %s307 = sshra.s32 %s304, 7
        %s308 = sand.u32 %s304, 127
        %s309 = smul.addr %s307, 8
        %s310 = scalar_lea.vmem [#allocation3], %s309
        %v311 = vld [vmem:[%s310] sm:$0xff]
        %v312 = vld [vmem:[%s310 + $0x10] sm:$0xff]
        %v313 = vld [vmem:[%s247] sm:$0xff]
        %v314 = vld [vmem:[%s247 + $0x8] sm:$0xff]
        %v315 = vld [vmem:[%s247 + $0x10] sm:$0xff]
        %v316 = vld [vmem:[%s247 + $0x18] sm:$0xff]
        %v317 = vld [vmem:[%s247 + $0x20] sm:$0xff]
        %v318 = vld [vmem:[%s247 + $0x28] sm:$0xff]
        %v319 = vld [vmem:[%s247 + $0x30] sm:$0xff]
        %v320 = vld [vmem:[%s247 + $0x38] sm:$0xff]
        %v321 = vld [vmem:[%s247 + $0x40] sm:$0xff]
        %v322 = vld [vmem:[%s247 + $0x48] sm:$0xff]
        %v323 = vld [vmem:[%s247 + $0x50] sm:$0xff]
        %v324 = vld [vmem:[%s247 + $0x58] sm:$0xff]
        %v325 = vld [vmem:[%s247 + $0x60] sm:$0xff]
        %v326 = vld [vmem:[%s247 + $0x68] sm:$0xff]
        %v327 = vld [vmem:[%s247 + $0x70] sm:$0xff]
        %v328 = vld [vmem:[%s247 + $0x78] sm:$0xff]
        %329 = vmatprep.subr.mxu0 0.0
        %330 = vmatpush1.msra.mxu0 %v313
        %331 = vmatprep.subr.mxu0 0.0
        %332 = vmatpush1.msra.mxu0 %v314
        %333 = vmatprep.subr.mxu0 0.0
        %334 = vmatpush1.msra.mxu0 %v315
        %335 = vmatprep.subr.mxu0 0.0
        %336 = vmatpush1.msra.mxu0 %v316
        %337 = vmatprep.subr.mxu0 0.0
        %338 = vmatpush1.msra.mxu0 %v317
        %339 = vmatprep.subr.mxu0 0.0
        %340 = vmatpush1.msra.mxu0 %v318
        %341 = vmatprep.subr.mxu0 0.0
        %342 = vmatpush1.msra.mxu0 %v319
        %343 = vmatprep.subr.mxu0 0.0
        %344 = vmatpush1.msra.mxu0 %v320
        %345 = vmatprep.subr.mxu0 0.0
        %346 = vmatpush1.msra.mxu0 %v321
        %347 = vmatprep.subr.mxu0 0.0
        %348 = vmatpush1.msra.mxu0 %v322
        %349 = vmatprep.subr.mxu0 0.0
        %350 = vmatpush1.msra.mxu0 %v323
        %351 = vmatprep.subr.mxu0 0.0
        %352 = vmatpush1.msra.mxu0 %v324
        %353 = vmatprep.subr.mxu0 0.0
        %354 = vmatpush1.msra.mxu0 %v325
        %355 = vmatprep.subr.mxu0 0.0
        %356 = vmatpush1.msra.mxu0 %v326
        %357 = vmatprep.subr.mxu0 0.0
        %358 = vmatpush1.msra.mxu0 %v327
        %359 = vmatprep.subr.mxu0 0.0
        %360 = vmatpush1.msra.mxu0 %v328
        %361 = vmatprep.subr.mxu0 0.0
        %362 = vmatpush1.msra.mxu0 0.0
        %363 = vmatprep.subr.mxu0 0.0
        %364 = vmatpush1.msra.mxu0 0.0
        %365 = vmatprep.subr.mxu0 0.0
        %366 = vmatpush1.msra.mxu0 0.0
        %367 = vmatprep.subr.mxu0 0.0
        %368 = vmatpush1.msra.mxu0 0.0
        %369 = vmatprep.subr.mxu0 0.0
        %370 = vmatpush1.msra.mxu0 0.0
        %371 = vmatprep.subr.mxu0 0.0
        %372 = vmatpush1.msra.mxu0 0.0
        %373 = vmatprep.subr.mxu0 0.0
        %374 = vmatpush1.msra.mxu0 0.0
        %375 = vmatprep.subr.mxu0 0.0
        %376 = vmatpush1.msra.mxu0 0.0
        %377 = vmatprep.subr.mxu0 0.0
        %378 = vmatpush1.msra.mxu0 0.0
        %379 = vmatprep.subr.mxu0 0.0
        %380 = vmatpush1.msra.mxu0 0.0
        %381 = vmatprep.subr.mxu0 0.0
        %382 = vmatpush1.msra.mxu0 0.0
        %383 = vmatprep.subr.mxu0 0.0
        %384 = vmatpush1.msra.mxu0 0.0
        %385 = vmatprep.subr.mxu0 0.0
        %386 = vmatpush1.msra.mxu0 0.0
        %387 = vmatprep.subr.mxu0 0.0
        %388 = vmatpush1.msra.mxu0 0.0
        %389 = vmatprep.subr.mxu0 0.0
        %390 = vmatpush1.msra.mxu0 0.0
        %391 = vmatprep.subr.mxu0 0.0
        %392 = vmatpush1.msra.mxu0 0.0
        %393 = vmatprep.mubr.f32.mxu0 0.0
        %394 = vmatmul.mubr.f32.gmra.mrb[0].mxu0 %v311
        %v395 = vpop.f32.mrb[0].mxu0
        %v396 = vadd.f32 0.0, %v395
        %v397 = vpop.f32.mrb[0].mxu0
        %398 = vmatprep.mubr.f32.mxu0 0.0
        %399 = vmatmul.mubr.f32.gmra.mrb[0].mxu0 %v312
        %v400 = vpop.f32.mrb[0].mxu0
        %v401 = vadd.f32 0.0, %v400
        %v402 = vpop.f32.mrb[0].mxu0
        %403 = vdwg.mxu0
        %v404 = vadd.f32 %v305, %v396
        %v405 = vadd.f32 %v306, %v401
        %406 = vst [vmem:[#allocation2] sm:$0xff] %v404
        %407 = vst [vmem:[#allocation2 + $0x8] sm:$0xff] %v405
        %p408 = scmp.eq.s32.totalorder %s25, 1
        // Predicated region
        $region57: #{tpu_custom_call.1} parent=35 // pred_check
          %p409 = pneg %p408
        $region58: #{tpu_custom_call.1} parent=35 // pred_check_branch
          %411 = sbr.rel (%p409) target = $region60
        $region59: #{tpu_custom_call.1} parent=35 // pred_region
          %v412 = vld [vmem:[#allocation2] sm:$0xff]
          %v413 = vld [vmem:[#allocation2 + $0x8] sm:$0xff]
          %v414 = vadd.f32 %v412, %v413
          %v415 = vrot.slane %v414, 4
          %v416 = vadd.f32 %v414, %v415
          %v417 = vrot.slane %v416, 2
          %v418 = vadd.f32 %v416, %v417
          %v419 = vrot.slane %v418, 1
          %v420 = vadd.f32 %v418, %v419
          %v421 = vmul.f32 %v420, 0.0625
          %v422 = vmul.f32 %v412, %v412
          %v423 = vmul.f32 %v413, %v413
          %v424 = vadd.f32 %v422, %v423
          %v425 = vrot.slane %v424, 4
          %v426 = vadd.f32 %v424, %v425
          %v427 = vrot.slane %v426, 2
          %v428 = vadd.f32 %v426, %v427
          %v429 = vrot.slane %v428, 1
          %v430 = vadd.f32 %v428, %v429
          %v431 = vmul.f32 %v430, 0.0625
          %v432 = vmul.f32 %v421, %v421
          %v433 = vsub.f32 %v431, %v432
          %v434 = vmax.f32 %v433, 0.0
          %v435 = vld [vmem:[%s289] sm:$0x1]
          %v436 = vadd.f32 %v434, 1e-05
          %v437 = vrsqrt.pop %v436
          %v438 = vmul.f32 %v435, %v437
          %v439 = vld [vmem:[%s289 + $0x1] sm:$0x1]
          %v440 = vmul.f32 %v421, %v438
          %v441 = vsub.f32 %v439, %v440
          %v442 = vlaneseq
          %v443 = vshrl.u32 %v442, 7
          %v444 = vsub.s32 0, %v443
          %v445 = vrot.slane %v438, %v444
          %v446 = vmul.f32 %v412, %v445
          %v447 = vmul.f32 %v413, %v445
          %v448 = vlaneseq
          %v449 = vshrl.u32 %v448, 7
          %v450 = vsub.s32 0, %v449
          %v451 = vrot.slane %v441, %v450
          %v452 = vadd.f32 %v446, %v451
          %v453 = vadd.f32 %v447, %v451
          %v454 = vmax.f32 %v452, 0.0
          %v455 = vmax.f32 %v453, 0.0
          %v456 = vld [vmem:[#allocation9] sm:$0xff]
          %v457 = vld [vmem:[#allocation9 + $0x8] sm:$0xff]
          %v458 = vld [vmem:[%s256] sm:$0xff]
          %v459 = vld [vmem:[%s256 + $0x8] sm:$0xff]
          %v460 = vld [vmem:[%s256 + $0x10] sm:$0xff]
          %v461 = vld [vmem:[%s256 + $0x18] sm:$0xff]
          %v462 = vld [vmem:[%s256 + $0x20] sm:$0xff]
          %v463 = vld [vmem:[%s256 + $0x28] sm:$0xff]
          %v464 = vld [vmem:[%s256 + $0x30] sm:$0xff]
          %v465 = vld [vmem:[%s256 + $0x38] sm:$0xff]
          %v466 = vld [vmem:[%s256 + $0x40] sm:$0xff]
          %v467 = vld [vmem:[%s256 + $0x48] sm:$0xff]
          %v468 = vld [vmem:[%s256 + $0x50] sm:$0xff]
          %v469 = vld [vmem:[%s256 + $0x58] sm:$0xff]
          %v470 = vld [vmem:[%s256 + $0x60] sm:$0xff]
          %v471 = vld [vmem:[%s256 + $0x68] sm:$0xff]
          %v472 = vld [vmem:[%s256 + $0x70] sm:$0xff]
          %v473 = vld [vmem:[%s256 + $0x78] sm:$0xff]
          %474 = vmatprep.subr.mxu0 0.0
          %475 = vmatpush1.msra.mxu0 %v458
          %476 = vmatprep.subr.mxu0 0.0
          %477 = vmatpush1.msra.mxu0 %v459
          %478 = vmatprep.subr.mxu0 0.0
          %479 = vmatpush1.msra.mxu0 %v460
          %480 = vmatprep.subr.mxu0 0.0
          %481 = vmatpush1.msra.mxu0 %v461
          %482 = vmatprep.subr.mxu0 0.0
          %483 = vmatpush1.msra.mxu0 %v462
          %484 = vmatprep.subr.mxu0 0.0
          %485 = vmatpush1.msra.mxu0 %v463
          %486 = vmatprep.subr.mxu0 0.0
          %487 = vmatpush1.msra.mxu0 %v464
          %488 = vmatprep.subr.mxu0 0.0
          %489 = vmatpush1.msra.mxu0 %v465
          %490 = vmatprep.subr.mxu0 0.0
          %491 = vmatpush1.msra.mxu0 %v466
          %492 = vmatprep.subr.mxu0 0.0
          %493 = vmatpush1.msra.mxu0 %v467
          %494 = vmatprep.subr.mxu0 0.0
          %495 = vmatpush1.msra.mxu0 %v468
          %496 = vmatprep.subr.mxu0 0.0
          %497 = vmatpush1.msra.mxu0 %v469
          %498 = vmatprep.subr.mxu0 0.0
          %499 = vmatpush1.msra.mxu0 %v470
          %500 = vmatprep.subr.mxu0 0.0
          %501 = vmatpush1.msra.mxu0 %v471
          %502 = vmatprep.subr.mxu0 0.0
          %503 = vmatpush1.msra.mxu0 %v472
          %504 = vmatprep.subr.mxu0 0.0
          %505 = vmatpush1.msra.mxu0 %v473
          %506 = vmatprep.subr.mxu0 0.0
          %507 = vmatpush1.msra.mxu0 0.0
          %508 = vmatprep.subr.mxu0 0.0
          %509 = vmatpush1.msra.mxu0 0.0
          %510 = vmatprep.subr.mxu0 0.0
          %511 = vmatpush1.msra.mxu0 0.0
          %512 = vmatprep.subr.mxu0 0.0
          %513 = vmatpush1.msra.mxu0 0.0
          %514 = vmatprep.subr.mxu0 0.0
          %515 = vmatpush1.msra.mxu0 0.0
          %516 = vmatprep.subr.mxu0 0.0
          %517 = vmatpush1.msra.mxu0 0.0
          %518 = vmatprep.subr.mxu0 0.0
          %519 = vmatpush1.msra.mxu0 0.0
          %520 = vmatprep.subr.mxu0 0.0
          %521 = vmatpush1.msra.mxu0 0.0
          %522 = vmatprep.subr.mxu0 0.0
          %523 = vmatpush1.msra.mxu0 0.0
          %524 = vmatprep.subr.mxu0 0.0
          %525 = vmatpush1.msra.mxu0 0.0
          %526 = vmatprep.subr.mxu0 0.0
          %527 = vmatpush1.msra.mxu0 0.0
          %528 = vmatprep.subr.mxu0 0.0
          %529 = vmatpush1.msra.mxu0 0.0
          %530 = vmatprep.subr.mxu0 0.0
          %531 = vmatpush1.msra.mxu0 0.0
          %532 = vmatprep.subr.mxu0 0.0
          %533 = vmatpush1.msra.mxu0 0.0
          %534 = vmatprep.subr.mxu0 0.0
          %535 = vmatpush1.msra.mxu0 0.0
          %536 = vmatprep.subr.mxu0 0.0
          %537 = vmatpush1.msra.mxu0 0.0
          %538 = vmatprep.mubr.f32.mxu0 0.0
          %539 = vmatmul.mubr.f32.gmra.mrb[0].mxu0 %v454
          %v540 = vpop.f32.mrb[0].mxu0
          %v541 = vadd.f32 0.0, %v540
          %v542 = vpop.f32.mrb[0].mxu0
          %543 = vmatprep.mubr.f32.mxu0 0.0
          %544 = vmatmul.mubr.f32.gmra.mrb[0].mxu0 %v455
          %v545 = vpop.f32.mrb[0].mxu0
          %v546 = vadd.f32 0.0, %v545
          %v547 = vpop.f32.mrb[0].mxu0
          %548 = vdwg.mxu0
          %v549 = vadd.f32 %v456, %v541
          %v550 = vadd.f32 %v457, %v546
          %551 = vst [vmem:[#allocation9] sm:$0xff] %v549
          %552 = vst [vmem:[#allocation9 + $0x8] sm:$0xff] %v550
          %p553 = scmp.eq.s32.totalorder %s24, 1
          // Predicated region
          $region61: #{tpu_custom_call.1} parent=59 // pred_check
            %p554 = pneg %p553
          $region62: #{tpu_custom_call.1} parent=59 // pred_check_branch
            %556 = sbr.rel (%p554) target = $region64
          $region63: #{tpu_custom_call.1} parent=59 // pred_region
            %v557 = vld [vmem:[#allocation9] sm:$0xff]
            %v558 = vld [vmem:[#allocation9 + $0x8] sm:$0xff]
            %v559 = vmul.f32 %v557, %v557
            %v560 = vmul.f32 %v558, %v558
            %561 = vadd.xlane.f32.xlu0 %v559
            %v562 = vpop.xlane.xlu0 %561
            %563 = vadd.xlane.f32.xlu0 %v560
            %v564 = vpop.xlane.xlu0 %563
            %v565 = vmax.f32 %v562, 1e-24
            %v566 = vmax.f32 %v564, 1e-24
            %v567 = vrsqrt.pop %v565
            %v568 = vrsqrt.pop %v566
            %v569 = vmul.f32 %v557, %v567
            %v570 = vmul.f32 %v558, %v568
            %571 = vst [vmem:[#allocation9] sm:$0xff] %v569
            %572 = vst [vmem:[#allocation9 + $0x8] sm:$0xff] %v570
          $region64: #{tpu_custom_call.1} parent=59 // pred_fallthru
            _
        $region60: #{tpu_custom_call.1} parent=35 // pred_fallthru
          _
        // Predicated region
        $region65: #{tpu_custom_call.1} parent=35 // pred_check
          %p573 = pneg %p146
        $region66: #{tpu_custom_call.1} parent=35 // pred_check_branch
          %575 = sbr.rel (%p573) target = $region68
        $region67: #{tpu_custom_call.1} parent=35 // pred_region
          %s577 = ssub.s32 256, 256
          %578 = vsyncadd [#allocation5], %s577
          %s579 = sshll.u32 [#allocation9], 4
          %s580 = int_to_ptr.vmem [resolvable:$true] %s579
          %585 = dma.vmem_to_hbm [thread:$0]  %s580, 256, %s4, [#allocation5], 128, 128, 8
        $region68: #{tpu_custom_call.1} parent=35 // pred_fallthru
          _
        // Predicated region
        $region69: #{tpu_custom_call.1} parent=35 // pred_check
          %p586 = pneg %p146
        $region70: #{tpu_custom_call.1} parent=35 // pred_check_branch
          %588 = sbr.rel (%p586) target = $region72
        $region71: #{tpu_custom_call.1} parent=35 // pred_region
          %589 = dma.done [#allocation5], 256
        $region72: #{tpu_custom_call.1} parent=35 // pred_fallthru
          _
      $region36: #{tpu_custom_call.1} parent=5 // pred_fallthru
        _
      %p590 = scmp.le.s32.totalorder 2, %s15
      // Predicated region
      $region73: #{tpu_custom_call.1} parent=5 // pred_check
        %p591 = pneg %p590
      $region74: #{tpu_custom_call.1} parent=5 // pred_check_branch
        %593 = sbr.rel (%p591) target = $region76
      $region75: #{tpu_custom_call.1} parent=5 // pred_region
        %s594 = ssub.s32 %s15, 2
      $region76: #{tpu_custom_call.1} parent=5 // pred_fallthru
        _
    $region6: #{tpu_custom_call.1} parent=1 // loop_footer
      %s19 = sadd.s32 1, %s15
    $region7: #{tpu_custom_call.1} parent=1 // loop_footer_branch
      %14 = sbr.rel target = $region3
    $region8: #{tpu_custom_call.1} parent=1 // loop_exit
      _
    %595 = vsyncpa [#allocation4], 1
    %s596 = scalar_lea.sflag [#allocation4], 1
    %597 = vsyncpa %s596, 1
    %598 = vsyncpa [#allocation7], 1
    %s599 = scalar_lea.sflag [#allocation7], 1
    %600 = vsyncpa %s599, 1
    %601 = vsyncpa [#allocation5], 1
    %s602 = scalar_lea.sflag [#allocation5], 1
    %603 = vsyncpa %s602, 1

</llo_original>
